<compile_context>
chip_gen: v6e
topology: v6e:2x2x1
jax: 0.10.0
libtpu: 0.0.40
codegen_flags: <defaults>
</compile_context>

<pallas_src>
import functools
import math

import jax
import jax.numpy as jnp
import numpy as np
from jax.experimental import pallas as pl
from jax.experimental.pallas import tpu as pltpu

_LANE = 128

# Taylor coefficients of cos(pi*y) as a polynomial in x = y^2, y in [-1, 1].
# Truncation error of the degree-16 (in y) series is < 1.4e-7.
_COS_PI_COEFFS = (
    -4.9348022005446793,      # -pi^2/2
    4.0587121264167682,       #  pi^4/24
    -1.3352627688545895,      # -pi^6/720
    0.23533063035889320,      #  pi^8/40320
    -0.025806891390014061,    # -pi^10/3628800
    0.0019295743094039231,    #  pi^12/479001600
    -1.0463810492484570e-4,   # -pi^14/87178291200
    4.3030695870329470e-6,    #  pi^16/20922789888000
)


def _cos_2pi(t):
    """cos(2*pi*t) via exact period-1 range reduction + even polynomial (pure VPU)."""
    y = 2.0 * (t - jnp.floor(t + 0.5))        # y in [-1, 1]; subtraction exact (Sterbenz)
    x = y * y
    r = x * _COS_PI_COEFFS[-1] + _COS_PI_COEFFS[-2]
    for c in _COS_PI_COEFFS[-3::-1]:
        r = r * x + c
    return r * x + 1.0                        # = cos(pi*y) = cos(2*pi*t)


def _fourier_kernel(a_ref, f_ref, p_ref, o_ref, *, use_mxu):
    """o = cos(2*pi * (a @ f_blockdiag + p_tiled)) for one lane-dense block.

    a_ref: (T, R)  R original rows packed per output row (R=1 -> plain column)
    f_ref: (R, L)  row r holds `frequencies` in lane segment r, zeros elsewhere
    p_ref: (1, L)  `phases` tiled R times
    o_ref: (T, L)  lane-dense output block, L = R*E (multiple of 128)
    """
    if use_mxu:
        # t[i, r*E+e] = a[i, r] * f[e] + p[e]; the block-diagonal rhs puts the segment
        # broadcast/FMA work on the otherwise-idle MXU.  HIGHEST precision is required:
        # the default f32 dot path degrades to bf16 passes and would miss 1e-4.
        t = jnp.dot(a_ref[...], f_ref[...],
                    preferred_element_type=jnp.float32,
                    precision=jax.lax.Precision.HIGHEST) + p_ref[...]
    else:
        # R == 1: plain VPU broadcast FMA is exact and cheap.
        t = a_ref[...] * f_ref[...] + p_ref[...]
    o_ref[...] = _cos_2pi(t)


def _round_up(x, m):
    return ((x + m - 1) // m) * m


def fourier(a, frequencies, phases, *, vmem_budget_bytes=20 * 1024 * 1024):
    """Pallas TPU Fourier embedding.  a: (N,); frequencies/phases: (E,) -> (N, E) f32."""
    N = int(a.shape[0])
    E = int(frequencies.shape[0])

    a = a.astype(jnp.float32)
    f32 = frequencies.astype(jnp.float32)
    p32 = phases.astype(jnp.float32)

    # Lane-dense packing: R = 128/gcd(E,128) output rows per L = lcm(E,128) lanes.
    # Fall back to R=1 (full-E block, masked stores) only if the block-diagonal rhs
    # would get unreasonably large (pathological E).
    R = _LANE // math.gcd(E, _LANE)
    L = R * E
    if R > 1 and R * L * 4 > 512 * 1024:
        R, L = 1, E

    if R > 1:
        eye = jnp.eye(R, dtype=jnp.float32)
        fseg = (eye[:, :, None] * f32[None, None, :]).reshape(R, L)   # block-diag segments
        pseg = jnp.tile(p32, R).reshape(1, L)
    else:
        fseg = f32.reshape(1, L)
        pseg = p32.reshape(1, L)

    # --- Tile sizing from a VMEM budget (double-buffered in + out blocks). ---
    in_row_bytes = 4 * _LANE * ((R + _LANE - 1) // _LANE)   # a-tile row, lane-padded in VMEM
    out_row_bytes = 4 * L
    max_rows = vmem_budget_bytes // (2 * (in_row_bytes + out_row_bytes))
    max_rows = max(8, (max_rows // 8) * 8)

    n_rows = -(-N // R)
    if n_rows > max_rows:
        tile_rows = max_rows
    elif n_rows >= 4096:
        # Large single-block problem: split into 2 grid steps so the "parallel" row
        # axis gives both of v7x's TensorCores work (per-step overhead stays <<1%).
        tile_rows = _round_up(-(-n_rows // 2), 8)
    else:
        tile_rows = _round_up(n_rows, 8)
    n_rows_pad = _round_up(n_rows, tile_rows)

    n_pad = n_rows_pad * R
    if n_pad != N:
        a = jnp.pad(a, (0, n_pad - N))
    # TODO(synk): this (N/R, R) view lane-pads to 128 in TPU layout (extra HBM pass for
    # E<=128); fuse with the consumer or accept a pre-packed lane-dense `a` to avoid it.
    a2 = a.reshape(n_rows_pad, R)

    grid = (n_rows_pad // tile_rows,)

    # Explicit scoped-VMEM limit sized to the actual footprint (+ margin): raises v5e's
    # 16 MiB default when needed, stays under v6e/v7x defaults and v7x's 64 MiB physical.
    const_bytes = 4 * (_round_up(R, 8) + 8) * L              # fseg + pseg, sublane-padded
    vmem_need = 2 * tile_rows * (in_row_bytes + out_row_bytes) + 2 * const_bytes
    vmem_limit = int(min(vmem_need + (8 << 20), 48 << 20))

    kernel = functools.partial(_fourier_kernel, use_mxu=(R > 1))
    out = pl.pallas_call(
        kernel,
        out_shape=jax.ShapeDtypeStruct((n_rows_pad, L), jnp.float32),
        grid=grid,
        in_specs=[
            pl.BlockSpec((tile_rows, R), lambda i: (i, 0)),
            pl.BlockSpec((R, L), lambda i: (0, 0)),
            pl.BlockSpec((1, L), lambda i: (0, 0)),
        ],
        out_specs=pl.BlockSpec((tile_rows, L), lambda i: (i, 0)),
        compiler_params=pltpu.CompilerParams(
            dimension_semantics=("parallel",),   # row axis shards across v7x's 2 TCs
            vmem_limit_bytes=vmem_limit,
        ),
    )(a2, fseg, pseg)

    # (n_rows_pad, L) row-major is bit-identical to (n_pad, E); drop row padding.
    # TODO(synk): for E<128 this reshape re-layouts the lane-packed result; production
    # consumers should read the packed (n_rows, L) view directly (or fuse).
    return out.reshape(n_rows_pad * R, E)[:N]


if __name__ == "__main__":
    key = jax.random.PRNGKey(0)

    def reference(a, f, p):
        return jnp.cos(2.0 * np.pi * (a[:, None] * f[None, :] + p[None, :]))

    # (N, E, vmem_budget): small shapes consistent with the module.
    checks = [
        (8, 32, None),        # demo shape: seq=8, embedding_size=32 (R=4, MXU path)
        (2053, 32, 1 << 20),  # ragged N + tiny budget: row padding + multi-block grid
        (64, 256, None),      # default embedding_size=256 (R=1, VPU broadcast path)
        (300, 48, None),      # E does not divide 128: lcm packing (R=8, L=384)
    ]
    for idx, (N, E, budget) in enumerate(checks):
        k_a, k_f, k_p = jax.random.split(jax.random.fold_in(key, idx), 3)
        a = jax.random.normal(k_a, (N,), dtype=jnp.float32)
        frequencies = jax.random.normal(k_f, (E,), dtype=jnp.float32)
        phases = jax.random.uniform(k_p, (E,), dtype=jnp.float32)

        kwargs = {} if budget is None else {"vmem_budget_bytes": budget}
        out = jax.block_until_ready(fourier(a, frequencies, phases, **kwargs))
        assert out.shape == (N, E) and out.dtype == jnp.float32

        ref = reference(a, frequencies, phases)
        np.testing.assert_allclose(np.asarray(out), np.asarray(ref), atol=1e-4, rtol=1e-4)

    print("KERNEL_OK")
</pallas_src>

<mosaic_0001>
module attributes {stable_mosaic.version = 11 : i64} {
  func.func @_fourier_kernel(%arg0: i32, %arg1: memref<8x4xf32, #tpu.memory_space<vmem>>, %arg2: memref<4x128xf32, #tpu.memory_space<vmem>>, %arg3: memref<1x128xf32, #tpu.memory_space<vmem>>, %arg4: memref<8x128xf32, #tpu.memory_space<vmem>>) attributes {dimension_semantics = [#tpu.dimension_semantics<parallel>], iteration_bounds = array<i64: 1>, scalar_prefetch = 0 : i64, scratch_operands = 0 : i64, tpu.core_type = #tpu.core_type<tc>, window_params = [{transform_indices = @transform_0, window_bounds = array<i64: 8, 4>}, {pipeline_mode = #tpu.pipeline_mode<synchronous>, transform_indices = @transform_1, window_bounds = array<i64: 4, 128>}, {pipeline_mode = #tpu.pipeline_mode<synchronous>, transform_indices = @transform_2, window_bounds = array<i64: 1, 128>}, {transform_indices = @transform_3, window_bounds = array<i64: 8, 128>}]} {
    %c0 = arith.constant 0 : index
    %c0_0 = arith.constant 0 : index
    %0 = vector.load %arg1[%c0, %c0_0] : memref<8x4xf32, #tpu.memory_space<vmem>>, vector<8x4xf32>
    %c0_1 = arith.constant 0 : index
    %c0_2 = arith.constant 0 : index
    %1 = vector.load %arg2[%c0_1, %c0_2] : memref<4x128xf32, #tpu.memory_space<vmem>>, vector<4x128xf32>
    %cst = arith.constant dense<0.000000e+00> : vector<8x128xf32>
    %2 = tpu.matmul %0, %1, %cst {dimension_numbers = #tpu.dot_dimension_numbers<[1], [0], [0], [1], [0, 0, 1, 1], [], []>, precision = #tpu.contract_precision<fp32>} : vector<8x4xf32>, vector<4x128xf32>, vector<8x128xf32> -> vector<8x128xf32>
    %c0_3 = arith.constant 0 : index
    %c0_4 = arith.constant 0 : index
    %3 = vector.load %arg3[%c0_3, %c0_4] : memref<1x128xf32, #tpu.memory_space<vmem>>, vector<1x128xf32>
    %4 = vector.broadcast %3 : vector<1x128xf32> to vector<8x128xf32>
    %5 = arith.addf %2, %4 : vector<8x128xf32>
    %cst_5 = arith.constant 5.000000e-01 : f32
    %6 = vector.broadcast %cst_5 : f32 to vector<8x128xf32>
    %7 = arith.addf %5, %6 : vector<8x128xf32>
    %8 = math.floor %7 : vector<8x128xf32>
    %9 = arith.subf %5, %8 : vector<8x128xf32>
    %cst_6 = arith.constant 2.000000e+00 : f32
    %10 = vector.broadcast %cst_6 : f32 to vector<8x128xf32>
    %11 = arith.mulf %10, %9 : vector<8x128xf32>
    %12 = arith.mulf %11, %11 : vector<8x128xf32>
    %cst_7 = arith.constant 4.30306955E-6 : f32
    %13 = vector.broadcast %cst_7 : f32 to vector<8x128xf32>
    %14 = arith.mulf %12, %13 : vector<8x128xf32>
    %cst_8 = arith.constant -1.04638108E-4 : f32
    %15 = vector.broadcast %cst_8 : f32 to vector<8x128xf32>
    %16 = arith.addf %14, %15 : vector<8x128xf32>
    %17 = arith.mulf %16, %12 : vector<8x128xf32>
    %cst_9 = arith.constant 0.0019295743 : f32
    %18 = vector.broadcast %cst_9 : f32 to vector<8x128xf32>
    %19 = arith.addf %17, %18 : vector<8x128xf32>
    %20 = arith.mulf %19, %12 : vector<8x128xf32>
    %cst_10 = arith.constant -0.0258068908 : f32
    %21 = vector.broadcast %cst_10 : f32 to vector<8x128xf32>
    %22 = arith.addf %20, %21 : vector<8x128xf32>
    %23 = arith.mulf %22, %12 : vector<8x128xf32>
    %cst_11 = arith.constant 0.235330626 : f32
    %24 = vector.broadcast %cst_11 : f32 to vector<8x128xf32>
    %25 = arith.addf %23, %24 : vector<8x128xf32>
    %26 = arith.mulf %25, %12 : vector<8x128xf32>
    %cst_12 = arith.constant -1.33526278 : f32
    %27 = vector.broadcast %cst_12 : f32 to vector<8x128xf32>
    %28 = arith.addf %26, %27 : vector<8x128xf32>
    %29 = arith.mulf %28, %12 : vector<8x128xf32>
    %cst_13 = arith.constant 4.05871201 : f32
    %30 = vector.broadcast %cst_13 : f32 to vector<8x128xf32>
    %31 = arith.addf %29, %30 : vector<8x128xf32>
    %32 = arith.mulf %31, %12 : vector<8x128xf32>
    %cst_14 = arith.constant -4.93480206 : f32
    %33 = vector.broadcast %cst_14 : f32 to vector<8x128xf32>
    %34 = arith.addf %32, %33 : vector<8x128xf32>
    %35 = arith.mulf %34, %12 : vector<8x128xf32>
    %cst_15 = arith.constant 1.000000e+00 : f32
    %36 = vector.broadcast %cst_15 : f32 to vector<8x128xf32>
    %37 = arith.addf %35, %36 : vector<8x128xf32>
    %c0_16 = arith.constant 0 : index
    %c0_17 = arith.constant 0 : index
    %38 = vector.load %arg4[%c0_16, %c0_17] : memref<8x128xf32, #tpu.memory_space<vmem>>, vector<8x128xf32>
    tpu.vector_store %arg4[%c0_16, %c0_17], %37 {strides = array<i32>} : memref<8x128xf32, #tpu.memory_space<vmem>>, vector<8x128xf32>,
    return
  }
  func.func @transform_0(%arg0: i32) -> (i32, i32) {
    %c0_i32 = arith.constant 0 : i32
    %c0_i32_0 = arith.constant 0 : i32
    return %arg0, %c0_i32 : i32, i32
  }
  func.func @transform_1(%arg0: i32) -> (i32, i32) {
    %c0_i32 = arith.constant 0 : i32
    %c0_i32_0 = arith.constant 0 : i32
    %c0_i32_1 = arith.constant 0 : i32
    return %c0_i32, %c0_i32_0 : i32, i32
  }
  func.func @transform_2(%arg0: i32) -> (i32, i32) {
    %c0_i32 = arith.constant 0 : i32
    %c0_i32_0 = arith.constant 0 : i32
    %c0_i32_1 = arith.constant 0 : i32
    return %c0_i32, %c0_i32_0 : i32, i32
  }
  func.func @transform_3(%arg0: i32) -> (i32, i32) {
    %c0_i32 = arith.constant 0 : i32
    %c0_i32_0 = arith.constant 0 : i32
    return %arg0, %c0_i32 : i32, i32
  }
}

</mosaic_0001>

<llo_original>
// kernel: tpu_custom_call.1
$region0: #{tpu_custom_call.1}
  #allocation0 [shape = 'u32[]', space=smem, size = 0x4, offset = 0x4, fixed_abs, tag = 'smem constant byte address 0x4 - core index']
  #allocation1 [shape = 'u32[144,128]{1,0:T(1,128)}', space=vmem, size = 0x12000, scoped, tag = 'internal scratch']
  %s0 = inlined_call_operand.vmem [shape: f32[8,4], index: 0, kind: input, shape index: {}]
  %s1 = inlined_call_operand.vmem [shape: f32[4,128], index: 1, kind: input, shape index: {}]
  %s2 = inlined_call_operand.vmem [shape: f32[1,128], index: 2, kind: input, shape index: {}]
  %s3 = inlined_call_operand.hbm [shape: f32[8,128], index: 3, kind: output, shape index: {}]
  %s4 = sld [smem:[#allocation0]]
  $region22: #{tpu_custom_call.1} parent=0
    _
  %s6 = ssub.s32 1, %s4
  %s7 = scalar_select 0, %s6, %s4
  $region1: #{tpu_custom_call.1} parent=0
    #allocation2 [shape = 'u8[4096]{0}', space=vmem, size = 0x1000, scoped, tag = 'output window, operand 0, single buffered']
    #allocation3 [shape = 's32[1]{0}', space=sflag, size = 0x4, scoped, tag = 'scoped memory for tpu_custom_call.1']
    %8 = vsyncpa [#allocation3], 0
    // Predicated region
    $region2: #{tpu_custom_call.1} parent=1 // pred_check
      _
    $region3: #{tpu_custom_call.1} parent=1 // pred_check_branch
      %10 = sbr.rel (0) target = $region5
    $region4: #{tpu_custom_call.1} parent=1 // pred_region
      _
    $region5: #{tpu_custom_call.1} parent=1 // pred_fallthru
      _
    // Predicated region
    $region6: #{tpu_custom_call.1} parent=1 // pred_check
      _
    $region7: #{tpu_custom_call.1} parent=1 // pred_check_branch
      %12 = sbr.rel (0) target = $region9
    $region8: #{tpu_custom_call.1} parent=1 // pred_region
      _
    $region9: #{tpu_custom_call.1} parent=1 // pred_fallthru
      _
    // Predicated region
    $region10: #{tpu_custom_call.1} parent=1 // pred_check
      _
    $region11: #{tpu_custom_call.1} parent=1 // pred_check_branch
      %14 = sbr.rel (0) target = $region13
    $region12: #{tpu_custom_call.1} parent=1 // pred_region
      _
    $region13: #{tpu_custom_call.1} parent=1 // pred_fallthru
      _
    %v15 = vld [vmem:[%s0] sm:$0xff]
    %v16 = vld [vmem:[%s1] sm:$0xf]
    %v17 = vld [vmem:[%s2] sm:$0x1]
    %v19 = vlaneseq
    %v20 = vshrl.u32 %v19, 7
    %v21 = vsub.s32 0, %v20
    %v22 = vrot.slane %v17, %v21
    %vm24 = vcmask 31744
    %v26 = vsel %vm24, %v15, 0
    %vm28 = vcmask 1043456
    %v30 = vsel %vm28, %v16, 0
    %32 = vmatprep.subr.mxu0 0.0
    %33 = vmatpush1.msra.mxu0 0.0
    %34 = vmatprep.subr.mxu0 0.0
    %35 = vmatpush1.msra.mxu0 0.0
    %36 = vmatprep.subr.mxu0 0.0
    %37 = vmatpush1.msra.mxu0 0.0
    %38 = vmatprep.subr.mxu0 0.0
    %39 = vmatpush1.msra.mxu0 0.0
    %40 = vmatprep.subr.mxu0 0.0
    %41 = vmatpush1.msra.mxu0 0.0
    %42 = vmatprep.subr.mxu0 0.0
    %43 = vmatpush1.msra.mxu0 0.0
    %44 = vmatprep.subr.mxu0 0.0
    %45 = vmatpush1.msra.mxu0 0.0
    %46 = vmatprep.subr.mxu0 0.0
    %47 = vmatpush1.msra.mxu0 0.0
    %48 = vmatprep.subr.mxu0 0.0
    %49 = vmatpush1.msra.mxu0 0.0
    %50 = vmatprep.subr.mxu0 0.0
    %51 = vmatpush1.msra.mxu0 0.0
    %52 = vmatprep.subr.mxu0 0.0
    %53 = vmatpush1.msra.mxu0 0.0
    %54 = vmatprep.subr.mxu0 0.0
    %55 = vmatpush1.msra.mxu0 0.0
    %56 = vmatprep.subr.mxu0 0.0
    %57 = vmatpush1.msra.mxu0 0.0
    %58 = vmatprep.subr.mxu0 0.0
    %59 = vmatpush1.msra.mxu0 0.0
    %60 = vmatprep.subr.mxu0 0.0
    %61 = vmatpush1.msra.mxu0 0.0
    %62 = vmatprep.subr.mxu0 0.0
    %v63 = vand.u32 %v30, 4294901760
    %64 = vmatpush1.msra.mxu0 %v63
    %65 = vmatprep.subr.mxu0 0.0
    %66 = vmatpush2.msra.mxu0 0.0
    %67 = vmatprep.subr.mxu0 0.0
    %68 = vmatpush2.msra.mxu0 0.0
    %69 = vmatprep.subr.mxu0 0.0
    %70 = vmatpush2.msra.mxu0 0.0
    %71 = vmatprep.subr.mxu0 0.0
    %72 = vmatpush2.msra.mxu0 0.0
    %73 = vmatprep.subr.mxu0 0.0
    %74 = vmatpush2.msra.mxu0 0.0
    %75 = vmatprep.subr.mxu0 0.0
    %76 = vmatpush2.msra.mxu0 0.0
    %77 = vmatprep.subr.mxu0 0.0
    %78 = vmatpush2.msra.mxu0 0.0
    %79 = vmatprep.subr.mxu0 0.0
    %80 = vmatpush2.msra.mxu0 0.0
    %81 = vmatprep.subr.mxu0 0.0
    %82 = vmatpush2.msra.mxu0 0.0
    %83 = vmatprep.subr.mxu0 0.0
    %84 = vmatpush2.msra.mxu0 0.0
    %85 = vmatprep.subr.mxu0 0.0
    %86 = vmatpush2.msra.mxu0 0.0
    %87 = vmatprep.subr.mxu0 0.0
    %88 = vmatpush2.msra.mxu0 0.0
    %89 = vmatprep.subr.mxu0 0.0
    %90 = vmatpush2.msra.mxu0 0.0
    %91 = vmatprep.subr.mxu0 0.0
    %92 = vmatpush2.msra.mxu0 0.0
    %93 = vmatprep.subr.mxu0 0.0
    %94 = vmatpush2.msra.mxu0 0.0
    %95 = vmatprep.subr.mxu0 0.0
    %96 = vmatpush2.msra.mxu0 0.0
    %97 = vmatprep.mubr.f32.mxu0 0.0
    %v98 = vand.u32 %v26, 4294901760
    %v99 = vsub.f32 %v26, %v98
    %v100 = vand.u32 %v99, 4294901760
    %v101 = vsub.f32 %v99, %v100
    %v102 = vand.u32 %v101, 4294901760
    %103 = vmatmul.mubr.f32.gmra.mxu0 %v102
    %v104 = vpop.f32.mrf.mxu0
    %v105 = vadd.f32 %v22, %v104
    %v106 = vpop.f32.mrf.mxu0
    %107 = vdwg.mxu0
    %108 = vmatprep.subr.mxu0 0.0
    %109 = vmatpush1.msra.mxu0 0.0
    %110 = vmatprep.subr.mxu0 0.0
    %111 = vmatpush1.msra.mxu0 0.0
    %112 = vmatprep.subr.mxu0 0.0
    %113 = vmatpush1.msra.mxu0 0.0
    %114 = vmatprep.subr.mxu0 0.0
    %115 = vmatpush1.msra.mxu0 0.0
    %116 = vmatprep.subr.mxu0 0.0
    %117 = vmatpush1.msra.mxu0 0.0
    %118 = vmatprep.subr.mxu0 0.0
    %119 = vmatpush1.msra.mxu0 0.0
    %120 = vmatprep.subr.mxu0 0.0
    %121 = vmatpush1.msra.mxu0 0.0
    %122 = vmatprep.subr.mxu0 0.0
    %123 = vmatpush1.msra.mxu0 0.0
    %124 = vmatprep.subr.mxu0 0.0
    %125 = vmatpush1.msra.mxu0 0.0
    %126 = vmatprep.subr.mxu0 0.0
    %127 = vmatpush1.msra.mxu0 0.0
    %128 = vmatprep.subr.mxu0 0.0
    %129 = vmatpush1.msra.mxu0 0.0
    %130 = vmatprep.subr.mxu0 0.0
    %131 = vmatpush1.msra.mxu0 0.0
    %132 = vmatprep.subr.mxu0 0.0
    %133 = vmatpush1.msra.mxu0 0.0
    %134 = vmatprep.subr.mxu0 0.0
    %135 = vmatpush1.msra.mxu0 0.0
    %136 = vmatprep.subr.mxu0 0.0
    %137 = vmatpush1.msra.mxu0 0.0
    %138 = vmatprep.subr.mxu0 0.0
    %v139 = vand.u32 %v30, 4294901760
    %v140 = vsub.f32 %v30, %v139
    %v141 = vand.u32 %v140, 4294901760
    %v142 = vsub.f32 %v140, %v141
    %v143 = vand.u32 %v142, 4294901760
    %144 = vmatpush1.msra.mxu0 %v143
    %145 = vmatprep.subr.mxu0 0.0
    %146 = vmatpush2.msra.mxu0 0.0
    %147 = vmatprep.subr.mxu0 0.0
    %148 = vmatpush2.msra.mxu0 0.0
    %149 = vmatprep.subr.mxu0 0.0
    %150 = vmatpush2.msra.mxu0 0.0
    %151 = vmatprep.subr.mxu0 0.0
    %152 = vmatpush2.msra.mxu0 0.0
    %153 = vmatprep.subr.mxu0 0.0
    %154 = vmatpush2.msra.mxu0 0.0
    %155 = vmatprep.subr.mxu0 0.0
    %156 = vmatpush2.msra.mxu0 0.0
    %157 = vmatprep.subr.mxu0 0.0
    %158 = vmatpush2.msra.mxu0 0.0
    %159 = vmatprep.subr.mxu0 0.0
    %160 = vmatpush2.msra.mxu0 0.0
    %161 = vmatprep.subr.mxu0 0.0
    %162 = vmatpush2.msra.mxu0 0.0
    %163 = vmatprep.subr.mxu0 0.0
    %164 = vmatpush2.msra.mxu0 0.0
    %165 = vmatprep.subr.mxu0 0.0
    %166 = vmatpush2.msra.mxu0 0.0
    %167 = vmatprep.subr.mxu0 0.0
    %168 = vmatpush2.msra.mxu0 0.0
    %169 = vmatprep.subr.mxu0 0.0
    %170 = vmatpush2.msra.mxu0 0.0
    %171 = vmatprep.subr.mxu0 0.0
    %172 = vmatpush2.msra.mxu0 0.0
    %173 = vmatprep.subr.mxu0 0.0
    %174 = vmatpush2.msra.mxu0 0.0
    %175 = vmatprep.subr.mxu0 0.0
    %176 = vmatpush2.msra.mxu0 0.0
    %177 = vmatprep.mubr.f32.mxu0 0.0
    %v178 = vand.u32 %v26, 4294901760
    %179 = vmatmul.mubr.f32.gmra.mxu0 %v178
    %v180 = vpop.f32.mrf.mxu0
    %v181 = vadd.f32 %v105, %v180
    %v182 = vpop.f32.mrf.mxu0
    %183 = vdwg.mxu0
    %184 = vmatprep.subr.mxu0 0.0
    %185 = vmatpush1.msra.mxu0 0.0
    %186 = vmatprep.subr.mxu0 0.0
    %187 = vmatpush1.msra.mxu0 0.0
    %188 = vmatprep.subr.mxu0 0.0
    %189 = vmatpush1.msra.mxu0 0.0
    %190 = vmatprep.subr.mxu0 0.0
    %191 = vmatpush1.msra.mxu0 0.0
    %192 = vmatprep.subr.mxu0 0.0
    %193 = vmatpush1.msra.mxu0 0.0
    %194 = vmatprep.subr.mxu0 0.0
    %195 = vmatpush1.msra.mxu0 0.0
    %196 = vmatprep.subr.mxu0 0.0
    %197 = vmatpush1.msra.mxu0 0.0
    %198 = vmatprep.subr.mxu0 0.0
    %199 = vmatpush1.msra.mxu0 0.0
    %200 = vmatprep.subr.mxu0 0.0
    %201 = vmatpush1.msra.mxu0 0.0
    %202 = vmatprep.subr.mxu0 0.0
    %203 = vmatpush1.msra.mxu0 0.0
    %204 = vmatprep.subr.mxu0 0.0
    %205 = vmatpush1.msra.mxu0 0.0
    %206 = vmatprep.subr.mxu0 0.0
    %207 = vmatpush1.msra.mxu0 0.0
    %208 = vmatprep.subr.mxu0 0.0
    %209 = vmatpush1.msra.mxu0 0.0
    %210 = vmatprep.subr.mxu0 0.0
    %211 = vmatpush1.msra.mxu0 0.0
    %212 = vmatprep.subr.mxu0 0.0
    %213 = vmatpush1.msra.mxu0 0.0
    %214 = vmatprep.subr.mxu0 0.0
    %v215 = vand.u32 %v30, 4294901760
    %v216 = vsub.f32 %v30, %v215
    %217 = vmatpush1.msra.mxu0 %v216
    %218 = vmatprep.subr.mxu0 0.0
    %219 = vmatpush2.msra.mxu0 0.0
    %220 = vmatprep.subr.mxu0 0.0
    %221 = vmatpush2.msra.mxu0 0.0
    %222 = vmatprep.subr.mxu0 0.0
    %223 = vmatpush2.msra.mxu0 0.0
    %224 = vmatprep.subr.mxu0 0.0
    %225 = vmatpush2.msra.mxu0 0.0
    %226 = vmatprep.subr.mxu0 0.0
    %227 = vmatpush2.msra.mxu0 0.0
    %228 = vmatprep.subr.mxu0 0.0
    %229 = vmatpush2.msra.mxu0 0.0
    %230 = vmatprep.subr.mxu0 0.0
    %231 = vmatpush2.msra.mxu0 0.0
    %232 = vmatprep.subr.mxu0 0.0
    %233 = vmatpush2.msra.mxu0 0.0
    %234 = vmatprep.subr.mxu0 0.0
    %235 = vmatpush2.msra.mxu0 0.0
    %236 = vmatprep.subr.mxu0 0.0
    %237 = vmatpush2.msra.mxu0 0.0
    %238 = vmatprep.subr.mxu0 0.0
    %239 = vmatpush2.msra.mxu0 0.0
    %240 = vmatprep.subr.mxu0 0.0
    %241 = vmatpush2.msra.mxu0 0.0
    %242 = vmatprep.subr.mxu0 0.0
    %243 = vmatpush2.msra.mxu0 0.0
    %244 = vmatprep.subr.mxu0 0.0
    %245 = vmatpush2.msra.mxu0 0.0
    %246 = vmatprep.subr.mxu0 0.0
    %247 = vmatpush2.msra.mxu0 0.0
    %248 = vmatprep.subr.mxu0 0.0
    %249 = vmatpush2.msra.mxu0 0.0
    %250 = vmatprep.mubr.f32.mxu0 0.0
    %v251 = vand.u32 %v26, 4294901760
    %v252 = vsub.f32 %v26, %v251
    %253 = vmatmul.mubr.f32.gmra.mxu0 %v252
    %v254 = vpop.f32.mrf.mxu0
    %v255 = vadd.f32 %v181, %v254
    %v256 = vpop.f32.mrf.mxu0
    %257 = vdwg.mxu0
    %258 = vmatprep.subr.mxu0 0.0
    %259 = vmatpush1.msra.mxu0 0.0
    %260 = vmatprep.subr.mxu0 0.0
    %261 = vmatpush1.msra.mxu0 0.0
    %262 = vmatprep.subr.mxu0 0.0
    %263 = vmatpush1.msra.mxu0 0.0
    %264 = vmatprep.subr.mxu0 0.0
    %265 = vmatpush1.msra.mxu0 0.0
    %266 = vmatprep.subr.mxu0 0.0
    %267 = vmatpush1.msra.mxu0 0.0
    %268 = vmatprep.subr.mxu0 0.0
    %269 = vmatpush1.msra.mxu0 0.0
    %270 = vmatprep.subr.mxu0 0.0
    %271 = vmatpush1.msra.mxu0 0.0
    %272 = vmatprep.subr.mxu0 0.0
    %273 = vmatpush1.msra.mxu0 0.0
    %274 = vmatprep.subr.mxu0 0.0
    %275 = vmatpush1.msra.mxu0 0.0
    %276 = vmatprep.subr.mxu0 0.0
    %277 = vmatpush1.msra.mxu0 0.0
    %278 = vmatprep.subr.mxu0 0.0
    %279 = vmatpush1.msra.mxu0 0.0
    %280 = vmatprep.subr.mxu0 0.0
    %281 = vmatpush1.msra.mxu0 0.0
    %282 = vmatprep.subr.mxu0 0.0
    %283 = vmatpush1.msra.mxu0 0.0
    %284 = vmatprep.subr.mxu0 0.0
    %285 = vmatpush1.msra.mxu0 0.0
    %286 = vmatprep.subr.mxu0 0.0
    %287 = vmatpush1.msra.mxu0 0.0
    %288 = vmatprep.subr.mxu0 0.0
    %v289 = vand.u32 %v30, 4294901760
    %290 = vmatpush1.msra.mxu0 %v289
    %291 = vmatprep.subr.mxu0 0.0
    %292 = vmatpush2.msra.mxu0 0.0
    %293 = vmatprep.subr.mxu0 0.0
    %294 = vmatpush2.msra.mxu0 0.0
    %295 = vmatprep.subr.mxu0 0.0
    %296 = vmatpush2.msra.mxu0 0.0
    %297 = vmatprep.subr.mxu0 0.0
    %298 = vmatpush2.msra.mxu0 0.0
    %299 = vmatprep.subr.mxu0 0.0
    %300 = vmatpush2.msra.mxu0 0.0
    %301 = vmatprep.subr.mxu0 0.0
    %302 = vmatpush2.msra.mxu0 0.0
    %303 = vmatprep.subr.mxu0 0.0
    %304 = vmatpush2.msra.mxu0 0.0
    %305 = vmatprep.subr.mxu0 0.0
    %306 = vmatpush2.msra.mxu0 0.0
    %307 = vmatprep.subr.mxu0 0.0
    %308 = vmatpush2.msra.mxu0 0.0
    %309 = vmatprep.subr.mxu0 0.0
    %310 = vmatpush2.msra.mxu0 0.0
    %311 = vmatprep.subr.mxu0 0.0
    %312 = vmatpush2.msra.mxu0 0.0
    %313 = vmatprep.subr.mxu0 0.0
    %314 = vmatpush2.msra.mxu0 0.0
    %315 = vmatprep.subr.mxu0 0.0
    %316 = vmatpush2.msra.mxu0 0.0
    %317 = vmatprep.subr.mxu0 0.0
    %318 = vmatpush2.msra.mxu0 0.0
    %319 = vmatprep.subr.mxu0 0.0
    %320 = vmatpush2.msra.mxu0 0.0
    %321 = vmatprep.subr.mxu0 0.0
    %322 = vmatpush2.msra.mxu0 0.0
    %323 = vmatprep.mubr.f32.mxu0 0.0
    %v324 = vand.u32 %v26, 4294901760
    %v325 = vsub.f32 %v26, %v324
    %v326 = vand.u32 %v325, 4294901760
    %327 = vmatmul.mubr.f32.gmra.mxu0 %v326
    %v328 = vpop.f32.mrf.mxu0
    %v329 = vadd.f32 %v255, %v328
    %v330 = vpop.f32.mrf.mxu0
    %331 = vdwg.mxu0
    %332 = vmatprep.subr.mxu0 0.0
    %333 = vmatpush1.msra.mxu0 0.0
    %334 = vmatprep.subr.mxu0 0.0
    %335 = vmatpush1.msra.mxu0 0.0
    %336 = vmatprep.subr.mxu0 0.0
    %337 = vmatpush1.msra.mxu0 0.0
    %338 = vmatprep.subr.mxu0 0.0
    %339 = vmatpush1.msra.mxu0 0.0
    %340 = vmatprep.subr.mxu0 0.0
    %341 = vmatpush1.msra.mxu0 0.0
    %342 = vmatprep.subr.mxu0 0.0
    %343 = vmatpush1.msra.mxu0 0.0
    %344 = vmatprep.subr.mxu0 0.0
    %345 = vmatpush1.msra.mxu0 0.0
    %346 = vmatprep.subr.mxu0 0.0
    %347 = vmatpush1.msra.mxu0 0.0
    %348 = vmatprep.subr.mxu0 0.0
    %349 = vmatpush1.msra.mxu0 0.0
    %350 = vmatprep.subr.mxu0 0.0
    %351 = vmatpush1.msra.mxu0 0.0
    %352 = vmatprep.subr.mxu0 0.0
    %353 = vmatpush1.msra.mxu0 0.0
    %354 = vmatprep.subr.mxu0 0.0
    %355 = vmatpush1.msra.mxu0 0.0
    %356 = vmatprep.subr.mxu0 0.0
    %357 = vmatpush1.msra.mxu0 0.0
    %358 = vmatprep.subr.mxu0 0.0
    %359 = vmatpush1.msra.mxu0 0.0
    %360 = vmatprep.subr.mxu0 0.0
    %361 = vmatpush1.msra.mxu0 0.0
    %362 = vmatprep.subr.mxu0 0.0
    %v363 = vand.u32 %v30, 4294901760
    %v364 = vsub.f32 %v30, %v363
    %v365 = vand.u32 %v364, 4294901760
    %366 = vmatpush1.msra.mxu0 %v365
    %367 = vmatprep.subr.mxu0 0.0
    %368 = vmatpush2.msra.mxu0 0.0
    %369 = vmatprep.subr.mxu0 0.0
    %370 = vmatpush2.msra.mxu0 0.0
    %371 = vmatprep.subr.mxu0 0.0
    %372 = vmatpush2.msra.mxu0 0.0
    %373 = vmatprep.subr.mxu0 0.0
    %374 = vmatpush2.msra.mxu0 0.0
    %375 = vmatprep.subr.mxu0 0.0
    %376 = vmatpush2.msra.mxu0 0.0
    %377 = vmatprep.subr.mxu0 0.0
    %378 = vmatpush2.msra.mxu0 0.0
    %379 = vmatprep.subr.mxu0 0.0
    %380 = vmatpush2.msra.mxu0 0.0
    %381 = vmatprep.subr.mxu0 0.0
    %382 = vmatpush2.msra.mxu0 0.0
    %383 = vmatprep.subr.mxu0 0.0
    %384 = vmatpush2.msra.mxu0 0.0
    %385 = vmatprep.subr.mxu0 0.0
    %386 = vmatpush2.msra.mxu0 0.0
    %387 = vmatprep.subr.mxu0 0.0
    %388 = vmatpush2.msra.mxu0 0.0
    %389 = vmatprep.subr.mxu0 0.0
    %390 = vmatpush2.msra.mxu0 0.0
    %391 = vmatprep.subr.mxu0 0.0
    %392 = vmatpush2.msra.mxu0 0.0
    %393 = vmatprep.subr.mxu0 0.0
    %394 = vmatpush2.msra.mxu0 0.0
    %395 = vmatprep.subr.mxu0 0.0
    %396 = vmatpush2.msra.mxu0 0.0
    %397 = vmatprep.subr.mxu0 0.0
    %398 = vmatpush2.msra.mxu0 0.0
    %399 = vmatprep.mubr.f32.mxu0 0.0
    %v400 = vand.u32 %v26, 4294901760
    %401 = vmatmul.mubr.f32.gmra.mxu0 %v400
    %v402 = vpop.f32.mrf.mxu0
    %v403 = vadd.f32 %v329, %v402
    %v404 = vpop.f32.mrf.mxu0
    %405 = vdwg.mxu0
    %406 = vmatprep.subr.mxu0 0.0
    %407 = vmatpush1.msra.mxu0 0.0
    %408 = vmatprep.subr.mxu0 0.0
    %409 = vmatpush1.msra.mxu0 0.0
    %410 = vmatprep.subr.mxu0 0.0
    %411 = vmatpush1.msra.mxu0 0.0
    %412 = vmatprep.subr.mxu0 0.0
    %413 = vmatpush1.msra.mxu0 0.0
    %414 = vmatprep.subr.mxu0 0.0
    %415 = vmatpush1.msra.mxu0 0.0
    %416 = vmatprep.subr.mxu0 0.0
    %417 = vmatpush1.msra.mxu0 0.0
    %418 = vmatprep.subr.mxu0 0.0
    %419 = vmatpush1.msra.mxu0 0.0
    %420 = vmatprep.subr.mxu0 0.0
    %421 = vmatpush1.msra.mxu0 0.0
    %422 = vmatprep.subr.mxu0 0.0
    %423 = vmatpush1.msra.mxu0 0.0
    %424 = vmatprep.subr.mxu0 0.0
    %425 = vmatpush1.msra.mxu0 0.0
    %426 = vmatprep.subr.mxu0 0.0
    %427 = vmatpush1.msra.mxu0 0.0
    %428 = vmatprep.subr.mxu0 0.0
    %429 = vmatpush1.msra.mxu0 0.0
    %430 = vmatprep.subr.mxu0 0.0
    %431 = vmatpush1.msra.mxu0 0.0
    %432 = vmatprep.subr.mxu0 0.0
    %433 = vmatpush1.msra.mxu0 0.0
    %434 = vmatprep.subr.mxu0 0.0
    %435 = vmatpush1.msra.mxu0 0.0
    %436 = vmatprep.subr.mxu0 0.0
    %v437 = vand.u32 %v30, 4294901760
    %438 = vmatpush1.msra.mxu0 %v437
    %439 = vmatprep.subr.mxu0 0.0
    %440 = vmatpush2.msra.mxu0 0.0
    %441 = vmatprep.subr.mxu0 0.0
    %442 = vmatpush2.msra.mxu0 0.0
    %443 = vmatprep.subr.mxu0 0.0
    %444 = vmatpush2.msra.mxu0 0.0
    %445 = vmatprep.subr.mxu0 0.0
    %446 = vmatpush2.msra.mxu0 0.0
    %447 = vmatprep.subr.mxu0 0.0
    %448 = vmatpush2.msra.mxu0 0.0
    %449 = vmatprep.subr.mxu0 0.0
    %450 = vmatpush2.msra.mxu0 0.0
    %451 = vmatprep.subr.mxu0 0.0
    %452 = vmatpush2.msra.mxu0 0.0
    %453 = vmatprep.subr.mxu0 0.0
    %454 = vmatpush2.msra.mxu0 0.0
    %455 = vmatprep.subr.mxu0 0.0
    %456 = vmatpush2.msra.mxu0 0.0
    %457 = vmatprep.subr.mxu0 0.0
    %458 = vmatpush2.msra.mxu0 0.0
    %459 = vmatprep.subr.mxu0 0.0
    %460 = vmatpush2.msra.mxu0 0.0
    %461 = vmatprep.subr.mxu0 0.0
    %462 = vmatpush2.msra.mxu0 0.0
    %463 = vmatprep.subr.mxu0 0.0
    %464 = vmatpush2.msra.mxu0 0.0
    %465 = vmatprep.subr.mxu0 0.0
    %466 = vmatpush2.msra.mxu0 0.0
    %467 = vmatprep.subr.mxu0 0.0
    %468 = vmatpush2.msra.mxu0 0.0
    %469 = vmatprep.subr.mxu0 0.0
    %470 = vmatpush2.msra.mxu0 0.0
    %471 = vmatprep.mubr.f32.mxu0 0.0
    %v472 = vand.u32 %v26, 4294901760
    %473 = vmatmul.mubr.f32.gmra.mxu0 %v472
    %v474 = vpop.f32.mrf.mxu0
    %v475 = vadd.f32 %v403, %v474
    %v476 = vpop.f32.mrf.mxu0
    %477 = vdwg.mxu0
    %v478 = vadd.f32 %v475, 0.5
    %v479 = vfloor.f32 %v478
    %v480 = vsub.f32 %v475, %v479
    %v481 = vmul.f32 %v480, 2.0
    %v482 = vmul.f32 %v481, %v481
    %v483 = vmul.f32 %v482, 4.3030695e-06
    %v484 = vadd.f32 %v483, -0.00010463811
    %v485 = vmul.f32 %v484, %v482
    %v486 = vadd.f32 %v485, 0.0019295743
    %v487 = vmul.f32 %v486, %v482
    %v488 = vadd.f32 %v487, -0.02580689
    %v489 = vmul.f32 %v488, %v482
    %v490 = vadd.f32 %v489, 0.23533063
    %v491 = vmul.f32 %v490, %v482
    %v492 = vadd.f32 %v491, -1.3352628
    %v493 = vmul.f32 %v492, %v482
    %v494 = vadd.f32 %v493, 4.058712
    %v495 = vmul.f32 %v494, %v482
    %v496 = vadd.f32 %v495, -4.934802
    %v497 = vmul.f32 %v496, %v482
    %v498 = vadd.f32 %v497, 1.0
    %499 = vst [vmem:[#allocation2] sm:$0xff] %v498
    // Predicated region
    $region14: #{tpu_custom_call.1} parent=1 // pred_check
      _
    $region15: #{tpu_custom_call.1} parent=1 // pred_check_branch
      %501 = sbr.rel (0) target = $region17
    $region16: #{tpu_custom_call.1} parent=1 // pred_region
      %s503 = ssub.s32 128, 128
      %504 = vsyncadd [#allocation3], %s503
      %s506 = sshll.u32 [#allocation2], 4
      %s507 = int_to_ptr.vmem [resolvable:$true] %s506
      %509 = dma.vmem_to_hbm [thread:$0]  %s507, 128, %s3, [#allocation3]
    $region17: #{tpu_custom_call.1} parent=1 // pred_fallthru
      _
    // Predicated region
    $region18: #{tpu_custom_call.1} parent=1 // pred_check
      _
    $region19: #{tpu_custom_call.1} parent=1 // pred_check_branch
      %511 = sbr.rel (0) target = $region21
    $region20: #{tpu_custom_call.1} parent=1 // pred_region
      %512 = dma.done [#allocation3], 128
    $region21: #{tpu_custom_call.1} parent=1 // pred_fallthru
      _
    %513 = vsyncpa [#allocation3], 1

</llo_original>
